<compile_context>
chip_gen: v5e
topology: v5e:2x2
jax: 0.10.0
libtpu: 0.0.40
codegen_flags: <defaults>
</compile_context>

<pallas_src>
import functools

import jax
import jax.numpy as jnp
from jax.experimental import pallas as pl
from jax.experimental.pallas import tpu as pltpu


def _round_up(x, m):
    return ((x + m - 1) // m) * m


def _layer_kernel(x_ref, w_ref, b_ref, o_ref):
    # x_ref: (bm, K_pad) tile of the collapsed (p*n, input_dim) activations
    # w_ref: (K_pad, N_pad) weight, resident across all grid steps
    # b_ref: (1, N_pad) bias (f32), resident across all grid steps
    # o_ref: (bm, N_pad) output tile
    y = jnp.dot(x_ref[...], w_ref[...], preferred_element_type=jnp.float32)
    y = y + b_ref[...]                       # bias broadcasts over the M tile
    o_ref[...] = jnp.maximum(y, 0.0).astype(o_ref.dtype)  # fused ReLU on VPU


@functools.partial(jax.jit, static_argnames=("block_m", "compute_dtype"))
def layer_forward(x, w, b, *, block_m=256, compute_dtype=None):
    """Forward pass of `Layer`.

    x: (p, n, input_dim)
    w: (input_dim, output_dim)   (the shared weight; torch tiles it over p)
    b: (..., output_dim)         (the shared bias)
    compute_dtype: dtype for the matmul operands (e.g. jnp.bfloat16);
                   accumulation is always f32, output keeps x.dtype.
    """
    p, n, input_dim = x.shape
    output_dim = w.shape[-1]
    out_dtype = x.dtype
    if compute_dtype is None:
        compute_dtype = out_dtype

    M, K, N = p * n, input_dim, output_dim

    # Lane-dense padding: last dims multiples of 128, M tile multiple of 8.
    K_pad = _round_up(K, 128)
    N_pad = _round_up(N, 128)
    bm = min(block_m, _round_up(M, 8))
    M_pad = _round_up(M, bm)

    x2 = x.reshape(M, K).astype(compute_dtype)
    x2 = jnp.pad(x2, ((0, M_pad - M), (0, K_pad - K)))
    w2 = jnp.pad(w.astype(compute_dtype), ((0, K_pad - K), (0, N_pad - N)))
    b2 = jnp.pad(b.reshape(1, -1).astype(jnp.float32), ((0, 0), (0, N_pad - N)))

    # Per-tile VMEM: 2x double-buffered x tile + 2x out tile + resident w/b.
    itemsize_c = jnp.dtype(compute_dtype).itemsize
    itemsize_o = jnp.dtype(out_dtype).itemsize
    vmem_need = (2 * bm * K_pad * itemsize_c
                 + 2 * bm * N_pad * itemsize_o
                 + K_pad * N_pad * itemsize_c
                 + N_pad * 4)
    vmem_limit = min(max(4 * vmem_need, 8 * 1024 * 1024), 32 * 1024 * 1024)

    out = pl.pallas_call(
        _layer_kernel,
        out_shape=jax.ShapeDtypeStruct((M_pad, N_pad), out_dtype),
        grid_spec=pltpu.PrefetchScalarGridSpec(
            num_scalar_prefetch=0,
            grid=(M_pad // bm,),
            in_specs=[
                pl.BlockSpec((bm, K_pad), lambda i: (i, 0)),
                pl.BlockSpec((K_pad, N_pad), lambda i: (0, 0)),
                pl.BlockSpec((1, N_pad), lambda i: (0, 0)),
            ],
            out_specs=pl.BlockSpec((bm, N_pad), lambda i: (i, 0)),
        ),
        compiler_params=pltpu.CompilerParams(
            dimension_semantics=("parallel",),   # shards M tiles across v7x's 2 TCs
            vmem_limit_bytes=int(vmem_limit),
        ),
    )(x2, w2, b2)

    return out[:M, :N].reshape(p, n, N)


def init_layer_params(key, input_dim, output_dim):
    # nn.init.trunc_normal_(w, mean=0, std=0.1, a=-0.2, b=0.2)
    w = 0.1 * jax.random.truncated_normal(
        key, -2.0, 2.0, (input_dim, output_dim), dtype=jnp.float32
    )
    b = jnp.full((1, output_dim), 0.1, dtype=jnp.float32)
    return w, b


def layer_reference(x, w, b):
    # Pure-JAX reference mirroring the PyTorch forward.
    y = jnp.einsum("pni,io->pno", x, w) + b.reshape(1, 1, -1)
    return jnp.maximum(y, 0.0)


if __name__ == "__main__":
    key = jax.random.PRNGKey(0)
    k_w, k_x, k_x2 = jax.random.split(key, 3)

    # Small shapes matching the module's forward.
    p, n, input_dim, output_dim = 2, 8, 32, 32
    w, b = init_layer_params(k_w, input_dim, output_dim)
    x = jax.random.normal(k_x, (p, n, input_dim), dtype=jnp.float32)

    ref = layer_reference(x, w, b)

    # 1) f32 operand path (exact check).
    out_f32 = jax.block_until_ready(layer_forward(x, w, b))
    assert out_f32.shape == (p, n, output_dim)
    assert jnp.allclose(out_f32, ref, atol=1e-5, rtol=1e-5)

    # 2) bf16 operand / f32 accumulate path (looser tolerance).
    out_bf16 = jax.block_until_ready(
        layer_forward(x, w, b, compute_dtype=jnp.bfloat16)
    )
    assert out_bf16.shape == (p, n, output_dim)
    assert jnp.allclose(out_bf16, ref, atol=2e-2, rtol=2e-2)

    # 3) Larger case exercising the M-tiled grid (M = p*n = 800, block_m = 256).
    p2, n2 = 4, 200
    x_big = jax.random.normal(k_x2, (p2, n2, input_dim), dtype=jnp.float32)
    ref_big = layer_reference(x_big, w, b)
    out_big = jax.block_until_ready(layer_forward(x_big, w, b))
    assert out_big.shape == (p2, n2, output_dim)
    assert jnp.allclose(out_big, ref_big, atol=1e-5, rtol=1e-5)

    print("KERNEL_OK")
</pallas_src>

<mosaic_0001>
module attributes {stable_mosaic.version = 11 : i64} {
  func.func @_layer_kernel(%arg0: i32, %arg1: memref<16x128xf32, #tpu.memory_space<vmem>>, %arg2: memref<128x128xf32, #tpu.memory_space<vmem>>, %arg3: memref<1x128xf32, #tpu.memory_space<vmem>>, %arg4: memref<16x128xf32, #tpu.memory_space<vmem>>) attributes {dimension_semantics = [#tpu.dimension_semantics<parallel>], iteration_bounds = array<i64: 1>, scalar_prefetch = 0 : i64, scratch_operands = 0 : i64, tpu.core_type = #tpu.core_type<tc>, window_params = [{transform_indices = @transform_0, window_bounds = array<i64: 16, 128>}, {pipeline_mode = #tpu.pipeline_mode<synchronous>, transform_indices = @transform_1, window_bounds = array<i64: 128, 128>}, {pipeline_mode = #tpu.pipeline_mode<synchronous>, transform_indices = @transform_2, window_bounds = array<i64: 1, 128>}, {transform_indices = @transform_3, window_bounds = array<i64: 16, 128>}]} {
    %c0 = arith.constant 0 : index
    %c0_0 = arith.constant 0 : index
    %0 = vector.load %arg1[%c0, %c0_0] : memref<16x128xf32, #tpu.memory_space<vmem>>, vector<16x128xf32>
    %c0_1 = arith.constant 0 : index
    %c0_2 = arith.constant 0 : index
    %1 = vector.load %arg2[%c0_1, %c0_2] : memref<128x128xf32, #tpu.memory_space<vmem>>, vector<128x128xf32>
    %cst = arith.constant dense<0.000000e+00> : vector<16x128xf32>
    %2 = tpu.matmul %0, %1, %cst {dimension_numbers = #tpu.dot_dimension_numbers<[1], [0], [0], [1], [0, 0, 1, 1], [], []>} : vector<16x128xf32>, vector<128x128xf32>, vector<16x128xf32> -> vector<16x128xf32>
    %c0_3 = arith.constant 0 : index
    %c0_4 = arith.constant 0 : index
    %3 = vector.load %arg3[%c0_3, %c0_4] : memref<1x128xf32, #tpu.memory_space<vmem>>, vector<1x128xf32>
    %4 = vector.broadcast %3 : vector<1x128xf32> to vector<16x128xf32>
    %5 = arith.addf %2, %4 : vector<16x128xf32>
    %cst_5 = arith.constant 0.000000e+00 : f32
    %6 = vector.broadcast %cst_5 : f32 to vector<16x128xf32>
    %7 = arith.maximumf %5, %6 : vector<16x128xf32>
    %c0_6 = arith.constant 0 : index
    %c0_7 = arith.constant 0 : index
    %8 = vector.load %arg4[%c0_6, %c0_7] : memref<16x128xf32, #tpu.memory_space<vmem>>, vector<16x128xf32>
    tpu.vector_store %arg4[%c0_6, %c0_7], %7 {strides = array<i32>} : memref<16x128xf32, #tpu.memory_space<vmem>>, vector<16x128xf32>,
    return
  }
  func.func @transform_0(%arg0: i32) -> (i32, i32) {
    %c0_i32 = arith.constant 0 : i32
    %c0_i32_0 = arith.constant 0 : i32
    return %arg0, %c0_i32 : i32, i32
  }
  func.func @transform_1(%arg0: i32) -> (i32, i32) {
    %c0_i32 = arith.constant 0 : i32
    %c0_i32_0 = arith.constant 0 : i32
    %c0_i32_1 = arith.constant 0 : i32
    return %c0_i32, %c0_i32_0 : i32, i32
  }
  func.func @transform_2(%arg0: i32) -> (i32, i32) {
    %c0_i32 = arith.constant 0 : i32
    %c0_i32_0 = arith.constant 0 : i32
    %c0_i32_1 = arith.constant 0 : i32
    return %c0_i32, %c0_i32_0 : i32, i32
  }
  func.func @transform_3(%arg0: i32) -> (i32, i32) {
    %c0_i32 = arith.constant 0 : i32
    %c0_i32_0 = arith.constant 0 : i32
    return %arg0, %c0_i32 : i32, i32
  }
}

</mosaic_0001>

<llo_original>
// kernel: layer_forward.1
$region0: #{layer_forward.1}
  #allocation0 [shape = 'u32[]', space=smem, size = 0x4, offset = 0x4, fixed_abs, tag = 'smem constant byte address 0x4 - core index']
  #allocation1 [shape = 'u32[72,128]{1,0:T(1,128)}', space=vmem, size = 0x9000, scoped, tag = 'internal scratch']
  %s0 = inlined_call_operand.vmem [shape: f32[16,128], index: 0, kind: input, shape index: {}]
  %s1 = inlined_call_operand.vmem [shape: f32[128,128], index: 1, kind: input, shape index: {}]
  %s2 = inlined_call_operand.vmem [shape: f32[1,128], index: 2, kind: input, shape index: {}]
  %s3 = inlined_call_operand.vmem [shape: f32[16,128], index: 3, kind: output, shape index: {}]
  %s4 = sld [smem:[#allocation0]]
  $region22: #{layer_forward.1} parent=0
    _
  %s6 = ssub.s32 1, %s4
  %s7 = scalar_select 0, %s6, %s4
  // Predicated region
  $region2: #{layer_forward.1} parent=0 // pred_check
    _
  $region3: #{layer_forward.1} parent=0 // pred_check_branch
    %9 = sbr.rel (0) target = $region5
  $region4: #{layer_forward.1} parent=0 // pred_region
    _
  $region5: #{layer_forward.1} parent=0 // pred_fallthru
    _
  // Predicated region
  $region6: #{layer_forward.1} parent=0 // pred_check
    _
  $region7: #{layer_forward.1} parent=0 // pred_check_branch
    %11 = sbr.rel (0) target = $region9
  $region8: #{layer_forward.1} parent=0 // pred_region
    _
  $region9: #{layer_forward.1} parent=0 // pred_fallthru
    _
  // Predicated region
  $region10: #{layer_forward.1} parent=0 // pred_check
    _
  $region11: #{layer_forward.1} parent=0 // pred_check_branch
    %13 = sbr.rel (0) target = $region13
  $region12: #{layer_forward.1} parent=0 // pred_region
    _
  $region13: #{layer_forward.1} parent=0 // pred_fallthru
    _
  %v14 = vld [vmem:[%s0] sm:$0xff]
  %v15 = vld [vmem:[%s0 + $0x8] sm:$0xff]
  %v16 = vld [vmem:[%s1] sm:$0xff]
  %v17 = vld [vmem:[%s1 + $0x8] sm:$0xff]
  %v18 = vld [vmem:[%s1 + $0x10] sm:$0xff]
  %v19 = vld [vmem:[%s1 + $0x18] sm:$0xff]
  %v20 = vld [vmem:[%s1 + $0x20] sm:$0xff]
  %v21 = vld [vmem:[%s1 + $0x28] sm:$0xff]
  %v22 = vld [vmem:[%s1 + $0x30] sm:$0xff]
  %v23 = vld [vmem:[%s1 + $0x38] sm:$0xff]
  %v24 = vld [vmem:[%s1 + $0x40] sm:$0xff]
  %v25 = vld [vmem:[%s1 + $0x48] sm:$0xff]
  %v26 = vld [vmem:[%s1 + $0x50] sm:$0xff]
  %v27 = vld [vmem:[%s1 + $0x58] sm:$0xff]
  %v28 = vld [vmem:[%s1 + $0x60] sm:$0xff]
  %v29 = vld [vmem:[%s1 + $0x68] sm:$0xff]
  %v30 = vld [vmem:[%s1 + $0x70] sm:$0xff]
  %v31 = vld [vmem:[%s1 + $0x78] sm:$0xff]
  %v32 = vld [vmem:[%s2] sm:$0x1]
  %v34 = vperm.slane %v32, 0
  %36 = vmatpush.msra.mxu0 %v31
  %37 = vmatpush.msra.mxu0 %v30
  %38 = vmatpush.msra.mxu0 %v29
  %39 = vmatpush.msra.mxu0 %v28
  %40 = vmatpush.msra.mxu0 %v27
  %41 = vmatpush.msra.mxu0 %v26
  %42 = vmatpush.msra.mxu0 %v25
  %43 = vmatpush.msra.mxu0 %v24
  %44 = vmatpush.msra.mxu0 %v23
  %45 = vmatpush.msra.mxu0 %v22
  %46 = vmatpush.msra.mxu0 %v21
  %47 = vmatpush.msra.mxu0 %v20
  %48 = vmatpush.msra.mxu0 %v19
  %49 = vmatpush.msra.mxu0 %v18
  %50 = vmatpush.msra.mxu0 %v17
  %51 = vmatpush.msra.mxu0 %v16
  %52 = vmatmul.f32.gmra.mxu0 %v14
  %v53 = vpop.f32.mrf.mxu0
  %v54 = vadd.f32 %v34, %v53
  %55 = vmatmul.f32.gmra.mxu0 %v15
  %v56 = vpop.f32.mrf.mxu0
  %v57 = vadd.f32 %v34, %v56
  %58 = vdwg.mxu0
  %v59 = vmax.f32 %v54, 0.0
  %v60 = vmax.f32 %v57, 0.0
  %61 = vst [vmem:[%s3] sm:$0xff] %v59
  %62 = vst [vmem:[%s3 + $0x8] sm:$0xff] %v60
  // Predicated region
  $region14: #{layer_forward.1} parent=0 // pred_check
    _
  $region15: #{layer_forward.1} parent=0 // pred_check_branch
    %64 = sbr.rel (0) target = $region17
  $region16: #{layer_forward.1} parent=0 // pred_region
    _
  $region17: #{layer_forward.1} parent=0 // pred_fallthru
    _
  // Predicated region
  $region18: #{layer_forward.1} parent=0 // pred_check
    _
  $region19: #{layer_forward.1} parent=0 // pred_check_branch
    %66 = sbr.rel (0) target = $region21
  $region20: #{layer_forward.1} parent=0 // pred_region
    _
  $region21: #{layer_forward.1} parent=0 // pred_fallthru
    _

</llo_original>
